<compile_context>
chip_gen: v7x
topology: tpu7x:2x2x1
jax: 0.10.0
libtpu: 0.0.40
codegen_flags: <defaults>
</compile_context>

<pallas_src>
import functools

import jax
import jax.numpy as jnp
from jax import lax
from jax.experimental import pallas as pl
from jax.experimental.pallas import tpu as pltpu


def _dice_kernel(x_ref, t_ref, num_ref, cnt_ref, *, ignore_index):
    i = pl.program_id(1)  # reduction step within this part

    # Outputs are resident across the (arbitrary) reduction axis -> init once.
    @pl.when(i == 0)
    def _():
        num_ref[...] = jnp.zeros_like(num_ref)
        cnt_ref[...] = jnp.zeros_like(cnt_ref)

    logits = x_ref[...].astype(jnp.float32)          # (C, TL)
    tgt = t_ref[...]                                 # (1, TL) int32
    c, tl = logits.shape

    valid = tgt != ignore_index                      # (1, TL)
    validf = valid.astype(jnp.float32)               # (1, TL)
    tgt_c = jnp.where(valid, tgt, 0)                 # target[mask] = 0

    # Column-wise softmax evaluated only at the target class:
    #   p[target] = exp(x[target] - max_c x) / sum_c exp(x[c] - max_c x)
    m = jnp.max(logits, axis=0, keepdims=True)       # (1, TL)
    e = jnp.exp(logits - m)                          # (C, TL)
    sum_e = jnp.sum(e, axis=0, keepdims=True)        # (1, TL)
    cls = lax.broadcasted_iota(jnp.int32, (c, tl), 0)
    e_tgt = jnp.sum(jnp.where(cls == tgt_c, e, 0.0), axis=0, keepdims=True)
    p_tgt = e_tgt / sum_e                            # (1, TL)

    # Elementwise (VPU) accumulation into lane-wide resident output blocks;
    # the cross-lane reduction happens once, outside the kernel.
    num_ref[...] += (p_tgt * validf)[None]
    cnt_ref[...] += validf[None]


def dice_loss(logits_nchw, target_nhw, eps=1e-4, ignore_index=-1):
    n, c, h, w = logits_nchw.shape
    p_total = n * h * w
    num_parts = 2  # leading "parallel" grid axis (uses both TCs on megacore/v7x)

    # --- tile plan: lane tile TL (multiple of 128), sized for VMEM ----------
    max_tl = (2 * 1024 * 1024) // (4 * c)            # <= ~2 MiB per logits buffer
    tl = min(8192, max_tl)
    tl = max(128, (tl // 128) * 128)
    per_part = -(-p_total // num_parts)
    if per_part < tl:                                # small problems: shrink TL
        tl = max(128, ((per_part + 127) // 128) * 128)
    chunk = num_parts * tl
    p_pad = -(-p_total // chunk) * chunk
    tiles_per_part = p_pad // chunk

    # --- glue: NCHW -> lane-dense (C, P), NHW -> (1, P); pad with ignore ----
    x = jnp.transpose(logits_nchw, (1, 0, 2, 3)).reshape(c, p_total)
    t = target_nhw.reshape(1, p_total).astype(jnp.int32)
    if p_pad != p_total:
        x = jnp.pad(x, ((0, 0), (0, p_pad - p_total)))
        t = jnp.pad(t, ((0, 0), (0, p_pad - p_total)),
                    constant_values=ignore_index)

    kernel = functools.partial(_dice_kernel, ignore_index=ignore_index)

    num_vec, cnt_vec = pl.pallas_call(
        kernel,
        out_shape=(
            jax.ShapeDtypeStruct((num_parts, 1, tl), jnp.float32),
            jax.ShapeDtypeStruct((num_parts, 1, tl), jnp.float32),
        ),
        grid_spec=pltpu.PrefetchScalarGridSpec(
            num_scalar_prefetch=0,
            grid=(num_parts, tiles_per_part),
            in_specs=[
                pl.BlockSpec((c, tl),
                             lambda p, i: (0, p * tiles_per_part + i)),
                pl.BlockSpec((1, tl),
                             lambda p, i: (0, p * tiles_per_part + i)),
            ],
            out_specs=[
                pl.BlockSpec((1, 1, tl), lambda p, i: (p, 0, 0)),
                pl.BlockSpec((1, 1, tl), lambda p, i: (p, 0, 0)),
            ],
        ),
        compiler_params=pltpu.CompilerParams(
            dimension_semantics=("parallel", "arbitrary"),
            vmem_limit_bytes=32 * 1024 * 1024,
        ),
    )(x, t)

    numerator = jnp.sum(num_vec)
    denominator = 2.0 * jnp.sum(cnt_vec)
    return 1.0 - (2.0 * numerator + eps) / (denominator + eps)


def _dice_loss_ref(logits_nchw, target_nhw, eps=1e-4, ignore_index=-1):
    """Plain-JAX reference mirroring the PyTorch forward."""
    p = jax.nn.softmax(logits_nchw, axis=1)                       # (N,C,H,W)
    mask = target_nhw == ignore_index                             # (N,H,W)
    tgt = jnp.where(mask, 0, target_nhw).astype(jnp.int32)
    onehot = jax.nn.one_hot(tgt, logits_nchw.shape[1], axis=1)    # (N,C,H,W)
    onehot = jnp.where(mask[:, None], 0.0, onehot)
    numerator = jnp.sum(p * onehot)
    denominator = jnp.sum(jnp.where(mask[:, None], 0.0, p + onehot))
    return 1.0 - (2.0 * numerator + eps) / (denominator + eps)


if __name__ == "__main__":
    key = jax.random.PRNGKey(0)
    k1, k2, k3 = jax.random.split(key, 3)

    N, C, H, W = 2, 4, 16, 16
    logits = jax.random.normal(k1, (N, C, H, W), dtype=jnp.float32)
    target = jax.random.randint(k2, (N, H, W), 0, C, dtype=jnp.int32)
    # Sprinkle some ignore_index (-1) positions.
    ignore_mask = jax.random.bernoulli(k3, 0.1, (N, H, W))
    target = jnp.where(ignore_mask, -1, target)

    loss = dice_loss(logits, target, eps=1e-4, ignore_index=-1)
    loss = jax.block_until_ready(loss)

    ref = _dice_loss_ref(logits, target, eps=1e-4, ignore_index=-1)
    assert jnp.allclose(loss, ref, atol=1e-5, rtol=1e-5), (loss, ref)

    print("KERNEL_OK")
</pallas_src>

<mosaic_0001>
module attributes {stable_mosaic.version = 11 : i64} {
  func.func @_dice_kernel(%arg0: i32, %arg1: i32, %arg2: memref<4x256xf32, #tpu.memory_space<vmem>>, %arg3: memref<1x256xi32, #tpu.memory_space<vmem>>, %arg4: memref<1x1x256xf32, #tpu.memory_space<vmem>>, %arg5: memref<1x1x256xf32, #tpu.memory_space<vmem>>) attributes {dimension_semantics = [#tpu.dimension_semantics<parallel>, #tpu.dimension_semantics<arbitrary>], iteration_bounds = array<i64: 2, 1>, scalar_prefetch = 0 : i64, scratch_operands = 0 : i64, tpu.core_type = #tpu.core_type<tc>, window_params = [{transform_indices = @transform_0, window_bounds = array<i64: 4, 256>}, {transform_indices = @transform_1, window_bounds = array<i64: 1, 256>}, {transform_indices = @transform_2, window_bounds = array<i64: 1, 1, 256>}, {transform_indices = @transform_3, window_bounds = array<i64: 1, 1, 256>}]} {
    %c0_i32 = arith.constant 0 : i32
    %0 = arith.cmpi eq, %arg1, %c0_i32 : i32
    %1 = arith.extui %0 : i1 to i32
    %c0_i32_0 = arith.constant 0 : i32
    %2 = arith.cmpi ne, %1, %c0_i32_0 : i32
    scf.if %2 {
      %cst_20 = arith.constant 0.000000e+00 : f32
      %35 = vector.broadcast %cst_20 : f32 to vector<1x1x256xf32>
      %c0_21 = arith.constant 0 : index
      %c0_22 = arith.constant 0 : index
      %c0_23 = arith.constant 0 : index
      %36 = vector.load %arg4[%c0_21, %c0_22, %c0_23] : memref<1x1x256xf32, #tpu.memory_space<vmem>>, vector<1x1x256xf32>
      tpu.vector_store %arg4[%c0_21, %c0_22, %c0_23], %35 {strides = array<i32>} : memref<1x1x256xf32, #tpu.memory_space<vmem>>, vector<1x1x256xf32>,
      %cst_24 = arith.constant 0.000000e+00 : f32
      %37 = vector.broadcast %cst_24 : f32 to vector<1x1x256xf32>
      %c0_25 = arith.constant 0 : index
      %c0_26 = arith.constant 0 : index
      %c0_27 = arith.constant 0 : index
      %38 = vector.load %arg5[%c0_25, %c0_26, %c0_27] : memref<1x1x256xf32, #tpu.memory_space<vmem>>, vector<1x1x256xf32>
      tpu.vector_store %arg5[%c0_25, %c0_26, %c0_27], %37 {strides = array<i32>} : memref<1x1x256xf32, #tpu.memory_space<vmem>>, vector<1x1x256xf32>,
    } else {
    }
    %c0 = arith.constant 0 : index
    %c0_1 = arith.constant 0 : index
    %3 = vector.load %arg2[%c0, %c0_1] : memref<4x256xf32, #tpu.memory_space<vmem>>, vector<4x256xf32>
    %c0_2 = arith.constant 0 : index
    %c0_3 = arith.constant 0 : index
    %4 = vector.load %arg3[%c0_2, %c0_3] : memref<1x256xi32, #tpu.memory_space<vmem>>, vector<1x256xi32>
    %c-1_i32 = arith.constant -1 : i32
    %5 = vector.broadcast %c-1_i32 : i32 to vector<1x256xi32>
    %6 = arith.cmpi ne, %4, %5 : vector<1x256xi32>
    %7 = arith.extui %6 : vector<1x256xi1> to vector<1x256xi32>
    %8 = arith.sitofp %7 : vector<1x256xi32> to vector<1x256xf32>
    %c0_i32_4 = arith.constant 0 : i32
    %9 = vector.broadcast %c0_i32_4 : i32 to vector<1x256xi32>
    %10 = arith.select %6, %4, %9 : vector<1x256xi1>, vector<1x256xi32>
    %cst = arith.constant dense<0xFF800000> : vector<256xf32>
    %11 = vector.multi_reduction <maximumf>, %3, %cst [0] : vector<4x256xf32> to vector<256xf32>
    %12 = vector.shape_cast %11 : vector<256xf32> to vector<1x256xf32>
    %13 = vector.broadcast %12 : vector<1x256xf32> to vector<4x256xf32>
    %14 = arith.subf %3, %13 : vector<4x256xf32>
    %15 = math.exp %14 : vector<4x256xf32>
    %cst_5 = arith.constant dense<0.000000e+00> : vector<256xf32>
    %16 = vector.multi_reduction <add>, %15, %cst_5 [0] : vector<4x256xf32> to vector<256xf32>
    %17 = vector.shape_cast %16 : vector<256xf32> to vector<1x256xf32>
    %18 = tpu.iota {dimensions = array<i32: 0>} : vector<4x256xi32>
    %19 = vector.broadcast %10 : vector<1x256xi32> to vector<4x256xi32>
    %20 = arith.cmpi eq, %18, %19 : vector<4x256xi32>
    %cst_6 = arith.constant 0.000000e+00 : f32
    %21 = vector.broadcast %cst_6 : f32 to vector<4x256xf32>
    %22 = arith.select %20, %15, %21 : vector<4x256xi1>, vector<4x256xf32>
    %cst_7 = arith.constant dense<0.000000e+00> : vector<256xf32>
    %23 = vector.multi_reduction <add>, %22, %cst_7 [0] : vector<4x256xf32> to vector<256xf32>
    %24 = vector.shape_cast %23 : vector<256xf32> to vector<1x256xf32>
    %25 = arith.divf %24, %17 : vector<1x256xf32>
    %c0_8 = arith.constant 0 : index
    %c0_9 = arith.constant 0 : index
    %c0_10 = arith.constant 0 : index
    %26 = vector.load %arg4[%c0_8, %c0_9, %c0_10] : memref<1x1x256xf32, #tpu.memory_space<vmem>>, vector<1x1x256xf32>
    %27 = arith.mulf %25, %8 : vector<1x256xf32>
    %28 = vector.shape_cast %27 : vector<1x256xf32> to vector<1x1x256xf32>
    %29 = arith.addf %26, %28 : vector<1x1x256xf32>
    %c0_11 = arith.constant 0 : index
    %c0_12 = arith.constant 0 : index
    %c0_13 = arith.constant 0 : index
    %30 = vector.load %arg4[%c0_11, %c0_12, %c0_13] : memref<1x1x256xf32, #tpu.memory_space<vmem>>, vector<1x1x256xf32>
    tpu.vector_store %arg4[%c0_11, %c0_12, %c0_13], %29 {strides = array<i32>} : memref<1x1x256xf32, #tpu.memory_space<vmem>>, vector<1x1x256xf32>,
    %c0_14 = arith.constant 0 : index
    %c0_15 = arith.constant 0 : index
    %c0_16 = arith.constant 0 : index
    %31 = vector.load %arg5[%c0_14, %c0_15, %c0_16] : memref<1x1x256xf32, #tpu.memory_space<vmem>>, vector<1x1x256xf32>
    %32 = vector.shape_cast %8 : vector<1x256xf32> to vector<1x1x256xf32>
    %33 = arith.addf %31, %32 : vector<1x1x256xf32>
    %c0_17 = arith.constant 0 : index
    %c0_18 = arith.constant 0 : index
    %c0_19 = arith.constant 0 : index
    %34 = vector.load %arg5[%c0_17, %c0_18, %c0_19] : memref<1x1x256xf32, #tpu.memory_space<vmem>>, vector<1x1x256xf32>
    tpu.vector_store %arg5[%c0_17, %c0_18, %c0_19], %33 {strides = array<i32>} : memref<1x1x256xf32, #tpu.memory_space<vmem>>, vector<1x1x256xf32>,
    return
  }
  func.func @transform_0(%arg0: i32, %arg1: i32) -> (i32, i32) {
    %c1_i32 = arith.constant 1 : i32
    %0 = arith.muli %arg0, %c1_i32 : i32
    %1 = arith.addi %0, %arg1 : i32
    %c0_i32 = arith.constant 0 : i32
    %c0_i32_0 = arith.constant 0 : i32
    return %c0_i32, %1 : i32, i32
  }
  func.func @transform_1(%arg0: i32, %arg1: i32) -> (i32, i32) {
    %c1_i32 = arith.constant 1 : i32
    %0 = arith.muli %arg0, %c1_i32 : i32
    %1 = arith.addi %0, %arg1 : i32
    %c0_i32 = arith.constant 0 : i32
    %c0_i32_0 = arith.constant 0 : i32
    return %c0_i32, %1 : i32, i32
  }
  func.func @transform_2(%arg0: i32, %arg1: i32) -> (i32, i32, i32) {
    %c0_i32 = arith.constant 0 : i32
    %c0_i32_0 = arith.constant 0 : i32
    %c0_i32_1 = arith.constant 0 : i32
    return %arg0, %c0_i32, %c0_i32_0 : i32, i32, i32
  }
  func.func @transform_3(%arg0: i32, %arg1: i32) -> (i32, i32, i32) {
    %c0_i32 = arith.constant 0 : i32
    %c0_i32_0 = arith.constant 0 : i32
    %c0_i32_1 = arith.constant 0 : i32
    return %arg0, %c0_i32, %c0_i32_0 : i32, i32, i32
  }
}

</mosaic_0001>

<llo_original>
// kernel: tpu_custom_call.1
$region0: #{tpu_custom_call.1}
  #allocation0 [shape = 'u32[]', space=smem, size = 0x4, offset = 0x4, fixed_abs, tag = 'smem constant byte address 0x4 - core index']
  #allocation1 [shape = 'u32[144,128]{1,0:T(1,128)}', space=vmem, size = 0x12000, scoped, tag = 'internal scratch']
  %s0 = inlined_call_operand.hbm [shape: f32[4,512], index: 0, kind: input, shape index: {}]
  %s1 = inlined_call_operand.hbm [shape: s32[1,512], index: 1, kind: input, shape index: {}]
  %s2 = inlined_call_operand.hbm [shape: f32[2,1,256], index: 2, kind: output, shape index: {0}]
  %s3 = inlined_call_operand.hbm [shape: f32[2,1,256], index: 3, kind: output, shape index: {1}]
  %4 = xla_tuple %s2, %s3
  %s5 = sld [smem:[#allocation0]]
  $region61: #{tpu_custom_call.1} parent=0
    _
  %s7 = ssub.s32 1, %s5
  %s8 = scalar_select 0, %s7, %s5
  $region1: #{tpu_custom_call.1} parent=0
    #allocation2 [shape = 'u8[8192]{0}', space=vmem, size = 0x2000, scoped, tag = 'input window, operand 0']
    #allocation3 [shape = 's32[2]{0}', space=sflag, size = 0x8, scoped, tag = 'scoped memory for tpu_custom_call.1']
    #allocation4 [shape = 's32[2]{0}', space=sflag, size = 0x8, scoped, tag = 'scoped memory for tpu_custom_call.1']
    #allocation5 [shape = 'u8[2048]{0}', space=vmem, size = 0x800, scoped, tag = 'input window, operand 1']
    #allocation6 [shape = 's32[2]{0}', space=sflag, size = 0x8, scoped, tag = 'scoped memory for tpu_custom_call.1']
    #allocation7 [shape = 'u8[2048]{0}', space=vmem, size = 0x800, scoped, tag = 'output window, operand 0']
    #allocation8 [shape = 'u8[2048]{0}', space=vmem, size = 0x800, scoped, tag = 'output window, operand 1']
    #allocation9 [shape = 's32[2]{0}', space=sflag, size = 0x8, scoped, tag = 'scoped memory for tpu_custom_call.1']
    %9 = vsyncpa [#allocation3], 0
    %s10 = scalar_lea.sflag [#allocation3], 1
    %11 = vsyncpa %s10, 0
    %12 = vsyncpa [#allocation6], 0
    %s13 = scalar_lea.sflag [#allocation6], 1
    %14 = vsyncpa %s13, 0
    %15 = vsyncpa [#allocation4], 0
    %s16 = scalar_lea.sflag [#allocation4], 1
    %17 = vsyncpa %s16, 0
    %18 = vsyncpa [#allocation9], 0
    %s19 = scalar_lea.sflag [#allocation9], 1
    %20 = vsyncpa %s19, 0
    loop: start=0, step=1, limit=4
    $region2: #{tpu_custom_call.1} parent=1 // loop_pre_header
      _
    $region3: #{tpu_custom_call.1} parent=1 // loop_header
      %s22 = sphi 0, %s26
      %p23 = scmp.ge.s32.totalorder %s22, 4
      %s29 = sphi 0, %s41
      %s30 = sphi 0, %s37
      %s31 = sphi 0, %s29
      %s32 = sphi 0, %s30
      %s33 = sphi 0, %s31
      %s34 = sphi 0, %s32
      %s46 = sphi 0, %s48
      %s49 = sphi 0, %s46
      %s50 = sphi 0, %s49
      %s66 = sphi 0, %s50
      %s74 = sphi 0, %s76
      %s77 = sphi 0, %s74
      %s78 = sphi 0, %s77
      %s94 = sphi 0, %s78
      %s100 = sphi 0, %s102
      %s103 = sphi 0, %s100
      %s104 = sphi 0, %s103
      %s120 = sphi 0, %s104
      %s126 = sphi 0, %s128
      %s129 = sphi 0, %s126
      %s130 = sphi 0, %s129
      %s146 = sphi 0, %s130
    $region4: #{tpu_custom_call.1} parent=1 // loop_header_branch
      %25 = sbr.rel (%p23) target = $region8
    $region5: #{tpu_custom_call.1} parent=1 // loop_body
      %s27 = ssub.s32 %s22, 1
      %s28 = ssub.s32 %s22, 2
      %s35 = sadd.s32 1, %s30
      %p36 = scmp.ge.s32.totalorder %s35, 1
      %s37 = scalar_select %p36, 0, %s35
      %s38 = sadd.s32 1, %s29
      %s39 = scalar_select %p36, %s38, %s29
      %p40 = scmp.ge.s32.totalorder %s39, 2
      %s41 = scalar_select %p40, 0, %s39
      %s42 = sadd.s32 %s29, %s30
      %s43 = sadd.s32 %s41, %s37
      %s44 = ssub.s32 %s42, %s43
      %p45 = scmp.eq.s32.totalorder %s44, 0
      %s47 = sadd.s32 %s46, 1
      %s48 = scalar_select %p45, %s46, %s47
      %p51 = pneg %p45
      %p52 = scmp.eq.s32.totalorder %s22, 1
      %p53 = por %p51, %p52
      %p54 = scmp.ne.s32.totalorder %s46, %s49
      %p55 = scmp.eq.s32.totalorder %s22, 0
      %p56 = por %p54, %p55
      %p57 = scmp.ne.s32.totalorder %s46, %s49
      %p58 = scmp.eq.s32.totalorder %s27, 1
      %p59 = por %p57, %p58
      %p60 = scmp.ne.s32.totalorder %s49, %s50
      %p61 = scmp.eq.s32.totalorder %s27, 0
      %p62 = por %p60, %p61
      %p63 = scmp.ne.s32.totalorder %s49, %s50
      %p64 = scmp.eq.s32.totalorder %s28, 1
      %p65 = por %p63, %p64
      %p67 = scmp.ne.s32.totalorder %s50, %s66
      %p68 = scmp.eq.s32.totalorder %s28, 0
      %p69 = por %p67, %p68
      %s70 = sadd.s32 %s29, %s30
      %s71 = sadd.s32 %s41, %s37
      %s72 = ssub.s32 %s70, %s71
      %p73 = scmp.eq.s32.totalorder %s72, 0
      %s75 = sadd.s32 %s74, 1
      %s76 = scalar_select %p73, %s74, %s75
      %p79 = pneg %p73
      %p80 = scmp.eq.s32.totalorder %s22, 1
      %p81 = por %p79, %p80
      %p82 = scmp.ne.s32.totalorder %s74, %s77
      %p83 = scmp.eq.s32.totalorder %s22, 0
      %p84 = por %p82, %p83
      %p85 = scmp.ne.s32.totalorder %s74, %s77
      %p86 = scmp.eq.s32.totalorder %s27, 1
      %p87 = por %p85, %p86
      %p88 = scmp.ne.s32.totalorder %s77, %s78
      %p89 = scmp.eq.s32.totalorder %s27, 0
      %p90 = por %p88, %p89
      %p91 = scmp.ne.s32.totalorder %s77, %s78
      %p92 = scmp.eq.s32.totalorder %s28, 1
      %p93 = por %p91, %p92
      %p95 = scmp.ne.s32.totalorder %s78, %s94
      %p96 = scmp.eq.s32.totalorder %s28, 0
      %p97 = por %p95, %p96
      %s98 = ssub.s32 %s29, %s41
      %p99 = scmp.eq.s32.totalorder %s98, 0
      %s101 = sadd.s32 %s100, 1
      %s102 = scalar_select %p99, %s100, %s101
      %p105 = pneg %p99
      %p106 = scmp.eq.s32.totalorder %s22, 1
      %p107 = por %p105, %p106
      %p108 = scmp.ne.s32.totalorder %s100, %s103
      %p109 = scmp.eq.s32.totalorder %s22, 0
      %p110 = por %p108, %p109
      %p111 = scmp.ne.s32.totalorder %s100, %s103
      %p112 = scmp.eq.s32.totalorder %s27, 1
      %p113 = por %p111, %p112
      %p114 = scmp.ne.s32.totalorder %s103, %s104
      %p115 = scmp.eq.s32.totalorder %s27, 0
      %p116 = por %p114, %p115
      %p117 = scmp.ne.s32.totalorder %s103, %s104
      %p118 = scmp.eq.s32.totalorder %s28, 1
      %p119 = por %p117, %p118
      %p121 = scmp.ne.s32.totalorder %s104, %s120
      %p122 = scmp.eq.s32.totalorder %s28, 0
      %p123 = por %p121, %p122
      %s124 = ssub.s32 %s29, %s41
      %p125 = scmp.eq.s32.totalorder %s124, 0
      %s127 = sadd.s32 %s126, 1
      %s128 = scalar_select %p125, %s126, %s127
      %p131 = pneg %p125
      %p132 = scmp.eq.s32.totalorder %s22, 1
      %p133 = por %p131, %p132
      %p134 = scmp.ne.s32.totalorder %s126, %s129
      %p135 = scmp.eq.s32.totalorder %s22, 0
      %p136 = por %p134, %p135
      %p137 = scmp.ne.s32.totalorder %s126, %s129
      %p138 = scmp.eq.s32.totalorder %s27, 1
      %p139 = por %p137, %p138
      %p140 = scmp.ne.s32.totalorder %s129, %s130
      %p141 = scmp.eq.s32.totalorder %s27, 0
      %p142 = por %p140, %p141
      %p143 = scmp.ne.s32.totalorder %s129, %s130
      %p144 = scmp.eq.s32.totalorder %s28, 1
      %p145 = por %p143, %p144
      %p147 = scmp.ne.s32.totalorder %s130, %s146
      %p148 = scmp.eq.s32.totalorder %s28, 0
      %p149 = por %p147, %p148
      %p150 = scmp.le.s32.totalorder 1, %s22
      %p151 = scmp.lt.s32.totalorder %s22, 3
      %p152 = pnand %p150, %p151
      %p153 = pneg %p152
      // Predicated region
      $region9: #{tpu_custom_call.1} parent=5 // pred_check
        _
      $region10: #{tpu_custom_call.1} parent=5 // pred_check_branch
        %155 = sbr.rel (%p152) target = $region12
      $region11: #{tpu_custom_call.1} parent=5 // pred_region
        %s156 = ssub.s32 %s22, 1
      $region12: #{tpu_custom_call.1} parent=5 // pred_fallthru
        _
      %p157 = scmp.lt.s32.totalorder %s22, 2
      // Predicated region
      $region13: #{tpu_custom_call.1} parent=5 // pred_check
        %p158 = pneg %p157
      $region14: #{tpu_custom_call.1} parent=5 // pred_check_branch
        %160 = sbr.rel (%p158) target = $region16
      $region15: #{tpu_custom_call.1} parent=5 // pred_region
        // Predicated region
        $region17: #{tpu_custom_call.1} parent=15 // pred_check
          %p161 = pneg %p56
        $region18: #{tpu_custom_call.1} parent=15 // pred_check_branch
          %163 = sbr.rel (%p161) target = $region20
        $region19: #{tpu_custom_call.1} parent=15 // pred_region
          %s164 = sand.u32 %s46, 1
          %s165 = scalar_lea.sflag [#allocation3], %s164
          %s166 = sand.u32 %s46, 1
          %s167 = smul.addr %s166, 8
          %s168 = scalar_lea.vmem [#allocation2], %s167
          %s169 = sadd.s32 %s29, %s30
          %s170 = smul.u32 2, %s169
          %s172 = ssub.s32 128, 128
          %173 = vsyncadd %s165, %s172
          %s174 = smul.addr %s170, 64
          %s175 = scalar_lea.hbm %s0, %s174
          %s177 = sshll.u32 %s168, 4
          %s178 = int_to_ptr.vmem [resolvable:$true] %s177
          %180 = dma.hbm_to_vmem [thread:$0]  %s175, 128, %s178, %s165
        $region20: #{tpu_custom_call.1} parent=15 // pred_fallthru
          _
        // Predicated region
        $region21: #{tpu_custom_call.1} parent=15 // pred_check
          %p181 = pneg %p84
        $region22: #{tpu_custom_call.1} parent=15 // pred_check_branch
          %183 = sbr.rel (%p181) target = $region24
        $region23: #{tpu_custom_call.1} parent=15 // pred_region
          %s184 = sand.u32 %s74, 1
          %s185 = scalar_lea.sflag [#allocation6], %s184
          %s186 = sand.u32 %s74, 1
          %s187 = smul.addr %s186, 2
          %s188 = scalar_lea.vmem [#allocation5], %s187
          %s189 = sadd.s32 %s29, %s30
          %s190 = smul.u32 2, %s189
          %s192 = ssub.s32 32, 32
          %193 = vsyncadd %s185, %s192
          %s194 = smul.addr %s190, 16
          %s195 = scalar_lea.hbm %s1, %s194
          %s197 = sshll.u32 %s188, 4
          %s198 = int_to_ptr.vmem [resolvable:$true] %s197
          %200 = dma.hbm_to_vmem [thread:$0]  %s195, 32, %s198, %s185
        $region24: #{tpu_custom_call.1} parent=15 // pred_fallthru
          _
      $region16: #{tpu_custom_call.1} parent=5 // pred_fallthru
        _
      %p201 = scmp.le.s32.totalorder 1, %s22
      %p202 = scmp.lt.s32.totalorder %s22, 3
      %p203 = pnand %p201, %p202
      %p204 = pneg %p203
      // Predicated region
      $region25: #{tpu_custom_call.1} parent=5 // pred_check
        _
      $region26: #{tpu_custom_call.1} parent=5 // pred_check_branch
        %206 = sbr.rel (%p203) target = $region28
      $region27: #{tpu_custom_call.1} parent=5 // pred_region
        %s207 = ssub.s32 %s22, 1
        %s208 = sand.u32 %s49, 1
        %s209 = scalar_lea.sflag [#allocation3], %s208
        %s210 = sand.u32 %s49, 1
        %s211 = smul.addr %s210, 8
        %s212 = scalar_lea.vmem [#allocation2], %s211
        // Predicated region
        $region29: #{tpu_custom_call.1} parent=27 // pred_check
          %p213 = pneg %p62
        $region30: #{tpu_custom_call.1} parent=27 // pred_check_branch
          %215 = sbr.rel (%p213) target = $region32
        $region31: #{tpu_custom_call.1} parent=27 // pred_region
          %216 = dma.done %s209, 128
        $region32: #{tpu_custom_call.1} parent=27 // pred_fallthru
          _
        %s217 = sand.u32 %s77, 1
        %s218 = scalar_lea.sflag [#allocation6], %s217
        %s219 = sand.u32 %s77, 1
        %s220 = smul.addr %s219, 2
        %s221 = scalar_lea.vmem [#allocation5], %s220
        // Predicated region
        $region33: #{tpu_custom_call.1} parent=27 // pred_check
          %p222 = pneg %p90
        $region34: #{tpu_custom_call.1} parent=27 // pred_check_branch
          %224 = sbr.rel (%p222) target = $region36
        $region35: #{tpu_custom_call.1} parent=27 // pred_region
          %225 = dma.done %s218, 32
        $region36: #{tpu_custom_call.1} parent=27 // pred_fallthru
          _
        %s226 = sand.u32 %s49, 1
        %s227 = scalar_lea.sflag [#allocation3], %s226
        %s228 = sand.u32 %s49, 1
        %s229 = smul.addr %s228, 8
        %s230 = scalar_lea.vmem [#allocation2], %s229
        %p231 = pneg %p62
        %p232 = pneg %p59
        %s233 = sand.u32 %s77, 1
        %s234 = scalar_lea.sflag [#allocation6], %s233
        %s235 = sand.u32 %s77, 1
        %s236 = smul.addr %s235, 2
        %s237 = scalar_lea.vmem [#allocation5], %s236
        %p238 = pneg %p90
        %p239 = pneg %p87
        %p240 = pneg %p116
        %p241 = pneg %p113
        %s242 = sand.u32 %s103, 1
        %s243 = scalar_lea.sflag [#allocation4], %s242
        %s244 = sand.u32 %s103, 1
        %s245 = smul.addr %s244, 2
        %s246 = scalar_lea.vmem [#allocation7], %s245
        %p247 = pneg %p142
        %p248 = pneg %p139
        %s249 = sand.u32 %s129, 1
        %s250 = scalar_lea.sflag [#allocation9], %s249
        %s251 = sand.u32 %s129, 1
        %s252 = smul.addr %s251, 2
        %s253 = scalar_lea.vmem [#allocation8], %s252
        %s254 = sadd.s32 %s31, %s32
        %s255 = smul.u32 2, %s254
        %s256 = sadd.s32 %s31, %s32
        %s257 = smul.u32 2, %s256
        %p258 = scmp.eq.s32.totalorder %s32, 0
        // Predicated region
        $region37: #{tpu_custom_call.1} parent=27 // pred_check
          %p259 = pneg %p258
        $region38: #{tpu_custom_call.1} parent=27 // pred_check_branch
          %261 = sbr.rel (%p259) target = $region40
        $region39: #{tpu_custom_call.1} parent=27 // pred_region
          %v262 = vlaneseq
          %vm263 = vcmp.ge.s32.totalorder %v262, 0
          %vm264 = vcmp.lt.s32.totalorder %v262, 256
          %vm265 = vmand %vm263, %vm264
          %266 = vst.msk [vmem:[%s246] sm:$0x3] %vm265, 0.0
          %267 = vst.msk [vmem:[%s253] sm:$0x3] %vm265, 0.0
        $region40: #{tpu_custom_call.1} parent=27 // pred_fallthru
          _
        %v268 = vld [vmem:[%s212] sm:$0xff]
        %v269 = vld [vmem:[%s221] sm:$0x3]
        %vm270 = vcmp.ne.s32.totalorder %v269, 4294967295
        %v271 = vsel %vm270, 1, 0
        %v272 = vcvt.s32.f32 %v271
        %v273 = vsel %vm270, %v269, 0
        %v275 = vcombine.high %v268, %v268
        %vm277 = vcmask 1043456
        %v278 = vsel %vm277, %v268, -inf
        %v279 = vrot.slane %v278, 4
        %v280 = vmax.f32 %v278, %v279
        %v281 = vrot.slane %v280, 2
        %v282 = vmax.f32 %v280, %v281
        %v283 = vrot.slane %v282, 1
        %v284 = vmax.f32 %v282, %v283
        %v285 = vsel %vm277, %v275, -inf
        %v286 = vrot.slane %v285, 4
        %v287 = vmax.f32 %v285, %v286
        %v288 = vrot.slane %v287, 2
        %v289 = vmax.f32 %v287, %v288
        %v290 = vrot.slane %v289, 1
        %v291 = vmax.f32 %v289, %v290
        %v294 = vcombine.low %v284, %v291
        %v296 = vsub.f32 %v268, %v294
        %v297 = vmul.f32 %v296, 1.442695
        %v298 = vpow.pop %v297
        %v300 = vcombine.high %v298, %v298
        %v302 = vsel %vm277, %v298, 0.0
        %v303 = vrot.slane %v302, 4
        %v304 = vadd.f32 %v302, %v303
        %v305 = vrot.slane %v304, 2
        %v306 = vadd.f32 %v304, %v305
        %v307 = vrot.slane %v306, 1
        %v308 = vadd.f32 %v306, %v307
        %v309 = vsel %vm277, %v300, 0.0
        %v310 = vrot.slane %v309, 4
        %v311 = vadd.f32 %v309, %v310
        %v312 = vrot.slane %v311, 2
        %v313 = vadd.f32 %v311, %v312
        %v314 = vrot.slane %v313, 1
        %v315 = vadd.f32 %v313, %v314
        %v316 = vlaneseq
        %v317 = vshrl.u32 %v316, 7
        %v318 = vlaneseq
        %v319 = vshrl.u32 %v318, 7
        %v320 = vsub.s32 0, %v319
        %v321 = vrot.slane %v273, %v320
        %v322 = vlaneseq
        %v323 = vshrl.u32 %v322, 7
        %v324 = vsub.s32 1, %v323
        %v325 = vrot.slane %v273, %v324
        %vm326 = vcmp.eq.s32.totalorder %v317, %v321
        %vm327 = vcmp.eq.s32.totalorder %v317, %v325
        %v328 = vsel %vm326, %v298, 0.0
        %v329 = vsel %vm327, %v300, 0.0
        %v330 = vsel %vm277, %v328, 0.0
        %v331 = vrot.slane %v330, 4
        %v332 = vadd.f32 %v330, %v331
        %v333 = vrot.slane %v332, 2
        %v334 = vadd.f32 %v332, %v333
        %v335 = vrot.slane %v334, 1
        %v336 = vadd.f32 %v334, %v335
        %v337 = vsel %vm277, %v329, 0.0
        %v338 = vrot.slane %v337, 4
        %v339 = vadd.f32 %v337, %v338
        %v340 = vrot.slane %v339, 2
        %v341 = vadd.f32 %v339, %v340
        %v342 = vrot.slane %v341, 1
        %v343 = vadd.f32 %v341, %v342
        %v344 = vrcp.pop %v308
        %v345 = vmul.f32 %v336, %v344
        %v346 = vrcp.pop %v315
        %v347 = vmul.f32 %v343, %v346
        %v348 = vld [vmem:[%s246] sm:$0x3]
        %v350 = vlaneseq
        %v351 = vshrl.u32 %v350, 7
        %v352 = vsub.s32 0, %v351
        %v353 = vrot.slane %v272, %v352
        %v354 = vlaneseq
        %v355 = vshrl.u32 %v354, 7
        %v356 = vsub.s32 1, %v355
        %v357 = vrot.slane %v272, %v356
        %v360 = vmul.f32 %v345, %v353
        %v361 = vmul.f32 %v347, %v357
        %v364 = vcombine.low %v360, %v361
        %v366 = vunpack.c.l.s4 1966171168
        %v367 = vunpack.c.0.s8 %v366
        %v368 = vlaneseq
        %v369 = vshrl.u32 %v368, 7
        %v370 = vsub.s32 %v367, %v369
        %v371 = vrot.slane %v364, %v370
        %v373 = vunpack.c.l.s4 1966171168
        %v374 = vunpack.c.0.s8 %v373
        %v375 = vlaneseq
        %v376 = vshrl.u32 %v375, 7
        %v377 = vsub.s32 %v374, %v376
        %v378 = vrot.slane %v371, %v377
        %v380 = vadd.f32 %v348, %v378
        %v381 = vlaneseq
        %vm382 = vcmp.ge.s32.totalorder %v381, 0
        %vm383 = vcmp.lt.s32.totalorder %v381, 256
        %vm384 = vmand %vm382, %vm383
        %385 = vst.msk [vmem:[%s246] sm:$0x3] %vm384, %v380
        %v386 = vld [vmem:[%s253] sm:$0x3]
        %v387 = vadd.f32 %v386, %v272
        %388 = vst.msk [vmem:[%s253] sm:$0x3] %vm384, %v387
        %s389 = sand.u32 %s103, 1
        %s390 = scalar_lea.sflag [#allocation4], %s389
        %s391 = sand.u32 %s103, 1
        %s392 = smul.addr %s391, 2
        %s393 = scalar_lea.vmem [#allocation7], %s392
        %s394 = sand.u32 %s129, 1
        %s395 = scalar_lea.sflag [#allocation9], %s394
        %s396 = sand.u32 %s129, 1
        %s397 = smul.addr %s396, 2
        %s398 = scalar_lea.vmem [#allocation8], %s397
        // Predicated region
        $region41: #{tpu_custom_call.1} parent=27 // pred_check
          %p399 = pneg %p113
        $region42: #{tpu_custom_call.1} parent=27 // pred_check_branch
          %401 = sbr.rel (%p399) target = $region44
        $region43: #{tpu_custom_call.1} parent=27 // pred_region
          %s403 = ssub.s32 32, 32
          %404 = vsyncadd %s390, %s403
          %s405 = smul.addr %s31, 2
          %s406 = smul.addr %s405, 16
          %s407 = scalar_lea.hbm %s2, %s406
          %s409 = sshll.u32 %s393, 4
          %s410 = int_to_ptr.vmem [resolvable:$true] %s409
          %412 = dma.vmem_to_hbm [thread:$0]  %s410, 32, %s407, %s390
        $region44: #{tpu_custom_call.1} parent=27 // pred_fallthru
          _
        // Predicated region
        $region45: #{tpu_custom_call.1} parent=27 // pred_check
          %p413 = pneg %p139
        $region46: #{tpu_custom_call.1} parent=27 // pred_check_branch
          %415 = sbr.rel (%p413) target = $region48
        $region47: #{tpu_custom_call.1} parent=27 // pred_region
          %s417 = ssub.s32 32, 32
          %418 = vsyncadd %s395, %s417
          %s419 = smul.addr %s31, 2
          %s420 = smul.addr %s419, 16
          %s421 = scalar_lea.hbm %s3, %s420
          %s423 = sshll.u32 %s398, 4
          %s424 = int_to_ptr.vmem [resolvable:$true] %s423
          %426 = dma.vmem_to_hbm [thread:$0]  %s424, 32, %s421, %s395
        $region48: #{tpu_custom_call.1} parent=27 // pred_fallthru
          _
      $region28: #{tpu_custom_call.1} parent=5 // pred_fallthru
        _
      %p427 = scmp.le.s32.totalorder 2, %s22
      // Predicated region
      $region49: #{tpu_custom_call.1} parent=5 // pred_check
        %p428 = pneg %p427
      $region50: #{tpu_custom_call.1} parent=5 // pred_check_branch
        %430 = sbr.rel (%p428) target = $region52
      $region51: #{tpu_custom_call.1} parent=5 // pred_region
        %s431 = ssub.s32 %s22, 2
        // Predicated region
        $region53: #{tpu_custom_call.1} parent=51 // pred_check
          %p432 = pneg %p119
        $region54: #{tpu_custom_call.1} parent=51 // pred_check_branch
          %434 = sbr.rel (%p432) target = $region56
        $region55: #{tpu_custom_call.1} parent=51 // pred_region
          %s435 = sand.u32 %s104, 1
          %s436 = scalar_lea.sflag [#allocation4], %s435
          %s437 = sand.u32 %s104, 1
          %s438 = smul.addr %s437, 2
          %s439 = scalar_lea.vmem [#allocation7], %s438
          %440 = dma.done %s436, 32
        $region56: #{tpu_custom_call.1} parent=51 // pred_fallthru
          _
        // Predicated region
        $region57: #{tpu_custom_call.1} parent=51 // pred_check
          %p441 = pneg %p145
        $region58: #{tpu_custom_call.1} parent=51 // pred_check_branch
          %443 = sbr.rel (%p441) target = $region60
        $region59: #{tpu_custom_call.1} parent=51 // pred_region
          %s444 = sand.u32 %s130, 1
          %s445 = scalar_lea.sflag [#allocation9], %s444
          %s446 = sand.u32 %s130, 1
          %s447 = smul.addr %s446, 2
          %s448 = scalar_lea.vmem [#allocation8], %s447
          %449 = dma.done %s445, 32
        $region60: #{tpu_custom_call.1} parent=51 // pred_fallthru
          _
      $region52: #{tpu_custom_call.1} parent=5 // pred_fallthru
        _
    $region6: #{tpu_custom_call.1} parent=1 // loop_footer
      %s26 = sadd.s32 1, %s22
    $region7: #{tpu_custom_call.1} parent=1 // loop_footer_branch
      %21 = sbr.rel target = $region3
    $region8: #{tpu_custom_call.1} parent=1 // loop_exit
      _
    %450 = vsyncpa [#allocation3], 1
    %s451 = scalar_lea.sflag [#allocation3], 1
    %452 = vsyncpa %s451, 1
    %453 = vsyncpa [#allocation6], 1
    %s454 = scalar_lea.sflag [#allocation6], 1
    %455 = vsyncpa %s454, 1
    %456 = vsyncpa [#allocation4], 1
    %s457 = scalar_lea.sflag [#allocation4], 1
    %458 = vsyncpa %s457, 1
    %459 = vsyncpa [#allocation9], 1
    %s460 = scalar_lea.sflag [#allocation9], 1
    %461 = vsyncpa %s460, 1

</llo_original>
